<compile_context>
chip_gen: v6e
topology: v6e:2x2x1
jax: 0.10.0
libtpu: 0.0.40
codegen_flags: <defaults>
</compile_context>

<pallas_src>
import jax
import jax.numpy as jnp
from jax.experimental import pallas as pl
from jax.experimental.pallas import tpu as pltpu


def _round_up(a, b):
    return (a + b - 1) // b * b


def _choose_batch_tile(B, n_dims):
    """Pick the batch tile: as large as VMEM allows, but with >=4 grid steps
    for large B so v7x's two TensorCores each get >=2 tiles."""
    # Dominant VMEM users per row: double-buffered f32 x tile (8 B), the
    # centered f32 temporary (4 B) and its bf16 copy (2 B).
    per_row_bytes = n_dims * (2 * 4 + 4 + 2)
    tb_max = 1024
    while tb_max > 128 and tb_max * per_row_bytes > 24 * 1024 * 1024:
        tb_max //= 2
    if B <= 128:
        # Single short block; block_shape == full array dims satisfies the
        # (8, 128) rule and avoids computing on padded garbage rows.
        return B
    # Aim for >= 4 grid steps; keep tb a multiple of 128 (sublane/lane friendly
    # for the x tile and the (tb, 1) output block).
    tb = _round_up(pl.cdiv(B, 4), 128)
    return max(128, min(tb, tb_max))


def _mlp_kernel(scal_ref, x_ref, w1_ref, b1_ref, w2_ref, b2_ref,
                w3_ref, b3_ref, w4_ref, o_ref):
    mean = scal_ref[0]        # f32 scalars from SMEM
    inv_std = scal_ref[1]
    b4 = scal_ref[2]

    # Layer 1.  Subtract the global mean on the f32 tile (VPU slack), cast to
    # bf16 for the MXU, fold 1/std into the epilogue.
    xc = x_ref[...] - mean                                   # f32 (TB, n_dims)
    h = jnp.dot(xc.astype(jnp.bfloat16), w1_ref[...],
                preferred_element_type=jnp.float32)
    h = h * inv_std + b1_ref[...]
    h = h * jax.nn.sigmoid(h)                  # LSwish(dim=-1): beta == 1 -> SiLU

    def hidden(h, w_ref, b_ref):
        # bf16 MXU operands, f32 accumulation; bias add / SiLU stay f32
        # (v5e has no bf16 VPU/EUP path).
        h = jnp.dot(h.astype(jnp.bfloat16), w_ref[...],
                    preferred_element_type=jnp.float32) + b_ref[...]
        return h * jax.nn.sigmoid(h)

    h = hidden(h, w2_ref, b2_ref)
    h = hidden(h, w3_ref, b3_ref)

    # Layer 4 (n_out == 1): f32 multiply + cross-lane reduce (XLU) -> (TB, 1).
    o_ref[...] = jnp.sum(h * w4_ref[...], axis=-1, keepdims=True) + b4


def prepare_params(params):
    """One-time parameter prep (hoisted out of the per-call forward path):
    transpose PyTorch (out, in) weights to (in, out), cast matmul operands to
    bf16, reshape biases to (1, n_hid) rows."""
    (w1, b1), (w2, b2), (w3, b3), (w4, b4) = params
    n_out = w4.shape[0]
    assert n_out == 1, "kernel specializes the last layer to n_out == 1"
    return dict(
        w1t=w1.T.astype(jnp.bfloat16),
        w2t=w2.T.astype(jnp.bfloat16),
        w3t=w3.T.astype(jnp.bfloat16),
        b1=b1.reshape(1, -1).astype(jnp.float32),
        b2=b2.reshape(1, -1).astype(jnp.float32),
        b3=b3.reshape(1, -1).astype(jnp.float32),
        w4=w4.reshape(1, -1).astype(jnp.float32),   # (1, n_hid) row vector
        b4=b4.reshape(()).astype(jnp.float32),      # scalar
    )


def normalized_mlp_forward(x, prepared, *, batch_tile=None):
    """x: (B, ...) like PyTorch NCHW.  Returns out.squeeze() like the module."""
    B = x.shape[0]
    xf = x.reshape(B, -1).astype(jnp.float32)       # reshape/no-op cast: no HBM pass
    n_dims = xf.shape[1]
    n_hid = prepared["w1t"].shape[1]

    # ---- normalize() stats: single fused HBM pass (sum + sum of squares) ----
    # torch.std() is unbiased (ddof = 1).  For |mean| >> std this one-pass form
    # loses a few f32 bits vs a two-pass variance, acceptable for detached
    # scaling constants.
    n = xf.size
    s1 = jnp.sum(xf)
    s2 = jnp.sum(xf * xf)
    mean = s1 / n
    var = jnp.maximum(s2 - s1 * mean, 0.0) / max(n - 1, 1)
    inv_std = jax.lax.rsqrt(var)
    scalars = jnp.stack([mean, inv_std, prepared["b4"]]).astype(jnp.float32)

    # ---- batch tiling (no padding; Pallas masks the partial last block) -----
    tb = batch_tile or _choose_batch_tile(B, n_dims)
    grid = (pl.cdiv(B, tb),)
    resident = lambda i: (0, 0)   # same block every step => DMA'd once, VMEM-resident

    in_specs = [
        pl.BlockSpec(memory_space=pltpu.MemorySpace.SMEM),   # [mean, inv_std, b4]
        pl.BlockSpec((tb, n_dims), lambda i: (i, 0)),        # x tile (f32, pipelined)
        pl.BlockSpec((n_dims, n_hid), resident),             # w1 (bf16)
        pl.BlockSpec((1, n_hid), resident),                  # b1
        pl.BlockSpec((n_hid, n_hid), resident),              # w2 (bf16)
        pl.BlockSpec((1, n_hid), resident),                  # b2
        pl.BlockSpec((n_hid, n_hid), resident),              # w3 (bf16)
        pl.BlockSpec((1, n_hid), resident),                  # b3
        pl.BlockSpec((1, n_hid), resident),                  # w4 row (f32)
    ]
    out_spec = pl.BlockSpec((tb, 1), lambda i: (i, 0))

    out = pl.pallas_call(
        _mlp_kernel,
        out_shape=jax.ShapeDtypeStruct((B, 1), jnp.float32),
        grid=grid,
        in_specs=in_specs,
        out_specs=out_spec,
        compiler_params=pltpu.CompilerParams(
            dimension_semantics=("parallel",),        # batch tiles -> 2 TCs on v7x
            vmem_limit_bytes=48 * 1024 * 1024,        # <= v7x 64 MiB physical
        ),
    )(scalars, xf,
      prepared["w1t"], prepared["b1"],
      prepared["w2t"], prepared["b2"],
      prepared["w3t"], prepared["b3"],
      prepared["w4"])

    return jnp.squeeze(out)


def init_params(key, n_dims, n_out=1, n_hid=128):
    """Deterministic init, shapes match nn.Linear: (out, in) weight + (out,) bias."""
    ks = jax.random.split(key, 8)

    def lin(kw, kb, fan_in, fan_out):
        bound = 1.0 / jnp.sqrt(fan_in)
        w = jax.random.uniform(kw, (fan_out, fan_in), jnp.float32, -bound, bound)
        b = jax.random.uniform(kb, (fan_out,), jnp.float32, -bound, bound)
        return w, b

    return (lin(ks[0], ks[1], n_dims, n_hid),
            lin(ks[2], ks[3], n_hid, n_hid),
            lin(ks[4], ks[5], n_hid, n_hid),
            lin(ks[6], ks[7], n_hid, n_out))


def _reference(x, params):
    """Pure-JAX f32 reference matching the PyTorch module."""
    B = x.shape[0]
    h = x.reshape(B, -1).astype(jnp.float32)
    mean = jnp.mean(h)
    std = jnp.std(h, ddof=1)
    h = (h - mean) / std
    (w1, b1), (w2, b2), (w3, b3), (w4, b4) = params
    for w, b in ((w1, b1), (w2, b2), (w3, b3)):
        h = h @ w.T + b
        h = h * jax.nn.sigmoid(h)
    return jnp.squeeze(h @ w4.T + b4)


if __name__ == "__main__":
    key = jax.random.PRNGKey(0)
    kx, kp = jax.random.split(key)

    B, C, H, W = 2, 4, 16, 16           # input like PyTorch NCHW
    n_dims = C * H * W                  # 1024 after x.view(B, -1)
    n_hid, n_out = 128, 1

    # Non-standardized input so the global normalize() is genuinely exercised.
    x = 1.5 + 3.0 * jax.random.normal(kx, (B, C, H, W), jnp.float32)
    params = init_params(kp, n_dims, n_out=n_out, n_hid=n_hid)

    prepared = prepare_params(params)               # one-time weight prep
    fwd = jax.jit(normalized_mlp_forward)
    out = jax.block_until_ready(fwd(x, prepared))

    ref = _reference(x, params)
    assert out.shape == ref.shape == (B,)
    # Kernel uses bf16 MXU operands with f32 accumulation; compare against the
    # full-f32 reference with a bf16-appropriate tolerance.
    assert jnp.allclose(out, ref, atol=3e-2, rtol=3e-2), (out, ref)
    print("KERNEL_OK")
</pallas_src>

<mosaic_0001>
module attributes {stable_mosaic.version = 11 : i64} {
  func.func @_mlp_kernel(%arg0: i32, %arg1: memref<3xf32, #tpu.memory_space<smem>>, %arg2: memref<2x1024xf32, #tpu.memory_space<vmem>>, %arg3: memref<1024x128xbf16, #tpu.memory_space<vmem>>, %arg4: memref<1x128xf32, #tpu.memory_space<vmem>>, %arg5: memref<128x128xbf16, #tpu.memory_space<vmem>>, %arg6: memref<1x128xf32, #tpu.memory_space<vmem>>, %arg7: memref<128x128xbf16, #tpu.memory_space<vmem>>, %arg8: memref<1x128xf32, #tpu.memory_space<vmem>>, %arg9: memref<1x128xf32, #tpu.memory_space<vmem>>, %arg10: memref<2x1xf32, #tpu.memory_space<vmem>>) attributes {dimension_semantics = [#tpu.dimension_semantics<parallel>], iteration_bounds = array<i64: 1>, scalar_prefetch = 0 : i64, scratch_operands = 0 : i64, tpu.core_type = #tpu.core_type<tc>, window_params = [{transform_indices = @transform_0, window_bounds = array<i64: 3>}, {transform_indices = @transform_1, window_bounds = array<i64: 2, 1024>}, {pipeline_mode = #tpu.pipeline_mode<synchronous>, transform_indices = @transform_2, window_bounds = array<i64: 1024, 128>}, {pipeline_mode = #tpu.pipeline_mode<synchronous>, transform_indices = @transform_3, window_bounds = array<i64: 1, 128>}, {pipeline_mode = #tpu.pipeline_mode<synchronous>, transform_indices = @transform_4, window_bounds = array<i64: 128, 128>}, {pipeline_mode = #tpu.pipeline_mode<synchronous>, transform_indices = @transform_5, window_bounds = array<i64: 1, 128>}, {pipeline_mode = #tpu.pipeline_mode<synchronous>, transform_indices = @transform_6, window_bounds = array<i64: 128, 128>}, {pipeline_mode = #tpu.pipeline_mode<synchronous>, transform_indices = @transform_7, window_bounds = array<i64: 1, 128>}, {pipeline_mode = #tpu.pipeline_mode<synchronous>, transform_indices = @transform_8, window_bounds = array<i64: 1, 128>}, {transform_indices = @transform_9, window_bounds = array<i64: 2, 1>}]} {
    %c0 = arith.constant 0 : index
    %0 = memref.load %arg1[%c0] : memref<3xf32, #tpu.memory_space<smem>>
    %c1 = arith.constant 1 : index
    %1 = memref.load %arg1[%c1] : memref<3xf32, #tpu.memory_space<smem>>
    %c2 = arith.constant 2 : index
    %2 = memref.load %arg1[%c2] : memref<3xf32, #tpu.memory_space<smem>>
    %c0_0 = arith.constant 0 : index
    %c0_1 = arith.constant 0 : index
    %3 = vector.load %arg2[%c0_0, %c0_1] : memref<2x1024xf32, #tpu.memory_space<vmem>>, vector<2x1024xf32>
    %4 = vector.broadcast %0 : f32 to vector<2x1024xf32>
    %5 = arith.subf %3, %4 : vector<2x1024xf32>
    %6 = arith.truncf %5 : vector<2x1024xf32> to vector<2x1024xbf16>
    %c0_2 = arith.constant 0 : index
    %c0_3 = arith.constant 0 : index
    %7 = vector.load %arg3[%c0_2, %c0_3] : memref<1024x128xbf16, #tpu.memory_space<vmem>>, vector<1024x128xbf16>
    %cst = arith.constant dense<0.000000e+00> : vector<2x128xf32>
    %8 = tpu.matmul %6, %7, %cst {dimension_numbers = #tpu.dot_dimension_numbers<[1], [0], [0], [1], [0, 0, 1, 1], [], []>} : vector<2x1024xbf16>, vector<1024x128xbf16>, vector<2x128xf32> -> vector<2x128xf32>
    %9 = vector.broadcast %1 : f32 to vector<2x128xf32>
    %10 = arith.mulf %8, %9 : vector<2x128xf32>
    %c0_4 = arith.constant 0 : index
    %c0_5 = arith.constant 0 : index
    %11 = vector.load %arg4[%c0_4, %c0_5] : memref<1x128xf32, #tpu.memory_space<vmem>>, vector<1x128xf32>
    %12 = vector.broadcast %11 : vector<1x128xf32> to vector<2x128xf32>
    %13 = arith.addf %10, %12 : vector<2x128xf32>
    %14 = arith.negf %13 : vector<2x128xf32>
    %15 = math.exp %14 : vector<2x128xf32>
    %cst_6 = arith.constant 1.000000e+00 : f32
    %16 = vector.broadcast %cst_6 : f32 to vector<2x128xf32>
    %17 = arith.addf %16, %15 : vector<2x128xf32>
    %18 = arith.divf %16, %17 : vector<2x128xf32>
    %19 = arith.mulf %13, %18 : vector<2x128xf32>
    %20 = arith.truncf %19 : vector<2x128xf32> to vector<2x128xbf16>
    %c0_7 = arith.constant 0 : index
    %c0_8 = arith.constant 0 : index
    %21 = vector.load %arg5[%c0_7, %c0_8] : memref<128x128xbf16, #tpu.memory_space<vmem>>, vector<128x128xbf16>
    %cst_9 = arith.constant dense<0.000000e+00> : vector<2x128xf32>
    %22 = tpu.matmul %20, %21, %cst_9 {dimension_numbers = #tpu.dot_dimension_numbers<[1], [0], [0], [1], [0, 0, 1, 1], [], []>} : vector<2x128xbf16>, vector<128x128xbf16>, vector<2x128xf32> -> vector<2x128xf32>
    %c0_10 = arith.constant 0 : index
    %c0_11 = arith.constant 0 : index
    %23 = vector.load %arg6[%c0_10, %c0_11] : memref<1x128xf32, #tpu.memory_space<vmem>>, vector<1x128xf32>
    %24 = vector.broadcast %23 : vector<1x128xf32> to vector<2x128xf32>
    %25 = arith.addf %22, %24 : vector<2x128xf32>
    %26 = arith.negf %25 : vector<2x128xf32>
    %27 = math.exp %26 : vector<2x128xf32>
    %cst_12 = arith.constant 1.000000e+00 : f32
    %28 = vector.broadcast %cst_12 : f32 to vector<2x128xf32>
    %29 = arith.addf %28, %27 : vector<2x128xf32>
    %30 = arith.divf %28, %29 : vector<2x128xf32>
    %31 = arith.mulf %25, %30 : vector<2x128xf32>
    %32 = arith.truncf %31 : vector<2x128xf32> to vector<2x128xbf16>
    %c0_13 = arith.constant 0 : index
    %c0_14 = arith.constant 0 : index
    %33 = vector.load %arg7[%c0_13, %c0_14] : memref<128x128xbf16, #tpu.memory_space<vmem>>, vector<128x128xbf16>
    %cst_15 = arith.constant dense<0.000000e+00> : vector<2x128xf32>
    %34 = tpu.matmul %32, %33, %cst_15 {dimension_numbers = #tpu.dot_dimension_numbers<[1], [0], [0], [1], [0, 0, 1, 1], [], []>} : vector<2x128xbf16>, vector<128x128xbf16>, vector<2x128xf32> -> vector<2x128xf32>
    %c0_16 = arith.constant 0 : index
    %c0_17 = arith.constant 0 : index
    %35 = vector.load %arg8[%c0_16, %c0_17] : memref<1x128xf32, #tpu.memory_space<vmem>>, vector<1x128xf32>
    %36 = vector.broadcast %35 : vector<1x128xf32> to vector<2x128xf32>
    %37 = arith.addf %34, %36 : vector<2x128xf32>
    %38 = arith.negf %37 : vector<2x128xf32>
    %39 = math.exp %38 : vector<2x128xf32>
    %cst_18 = arith.constant 1.000000e+00 : f32
    %40 = vector.broadcast %cst_18 : f32 to vector<2x128xf32>
    %41 = arith.addf %40, %39 : vector<2x128xf32>
    %42 = arith.divf %40, %41 : vector<2x128xf32>
    %43 = arith.mulf %37, %42 : vector<2x128xf32>
    %c0_19 = arith.constant 0 : index
    %c0_20 = arith.constant 0 : index
    %44 = vector.load %arg9[%c0_19, %c0_20] : memref<1x128xf32, #tpu.memory_space<vmem>>, vector<1x128xf32>
    %45 = vector.broadcast %44 : vector<1x128xf32> to vector<2x128xf32>
    %46 = arith.mulf %43, %45 : vector<2x128xf32>
    %cst_21 = arith.constant dense<0.000000e+00> : vector<2xf32>
    %47 = vector.multi_reduction <add>, %46, %cst_21 [1] : vector<2x128xf32> to vector<2xf32>
    %48 = vector.shape_cast %47 : vector<2xf32> to vector<2x1xf32>
    %49 = vector.broadcast %2 : f32 to vector<2x1xf32>
    %50 = arith.addf %48, %49 : vector<2x1xf32>
    %c0_22 = arith.constant 0 : index
    %c0_23 = arith.constant 0 : index
    %51 = vector.load %arg10[%c0_22, %c0_23] : memref<2x1xf32, #tpu.memory_space<vmem>>, vector<2x1xf32>
    tpu.vector_store %arg10[%c0_22, %c0_23], %50 {strides = array<i32>} : memref<2x1xf32, #tpu.memory_space<vmem>>, vector<2x1xf32>,
    return
  }
  func.func @transform_0(%arg0: i32) -> i32 {
    %c0_i32 = arith.constant 0 : i32
    %c0_i32_0 = arith.constant 0 : i32
    return %c0_i32 : i32
  }
  func.func @transform_1(%arg0: i32) -> (i32, i32) {
    %c0_i32 = arith.constant 0 : i32
    %c0_i32_0 = arith.constant 0 : i32
    return %arg0, %c0_i32 : i32, i32
  }
  func.func @transform_2(%arg0: i32) -> (i32, i32) {
    %c0_i32 = arith.constant 0 : i32
    %c0_i32_0 = arith.constant 0 : i32
    %c0_i32_1 = arith.constant 0 : i32
    return %c0_i32, %c0_i32_0 : i32, i32
  }
  func.func @transform_3(%arg0: i32) -> (i32, i32) {
    %c0_i32 = arith.constant 0 : i32
    %c0_i32_0 = arith.constant 0 : i32
    %c0_i32_1 = arith.constant 0 : i32
    return %c0_i32, %c0_i32_0 : i32, i32
  }
  func.func @transform_4(%arg0: i32) -> (i32, i32) {
    %c0_i32 = arith.constant 0 : i32
    %c0_i32_0 = arith.constant 0 : i32
    %c0_i32_1 = arith.constant 0 : i32
    return %c0_i32, %c0_i32_0 : i32, i32
  }
  func.func @transform_5(%arg0: i32) -> (i32, i32) {
    %c0_i32 = arith.constant 0 : i32
    %c0_i32_0 = arith.constant 0 : i32
    %c0_i32_1 = arith.constant 0 : i32
    return %c0_i32, %c0_i32_0 : i32, i32
  }
  func.func @transform_6(%arg0: i32) -> (i32, i32) {
    %c0_i32 = arith.constant 0 : i32
    %c0_i32_0 = arith.constant 0 : i32
    %c0_i32_1 = arith.constant 0 : i32
    return %c0_i32, %c0_i32_0 : i32, i32
  }
  func.func @transform_7(%arg0: i32) -> (i32, i32) {
    %c0_i32 = arith.constant 0 : i32
    %c0_i32_0 = arith.constant 0 : i32
    %c0_i32_1 = arith.constant 0 : i32
    return %c0_i32, %c0_i32_0 : i32, i32
  }
  func.func @transform_8(%arg0: i32) -> (i32, i32) {
    %c0_i32 = arith.constant 0 : i32
    %c0_i32_0 = arith.constant 0 : i32
    %c0_i32_1 = arith.constant 0 : i32
    return %c0_i32, %c0_i32_0 : i32, i32
  }
  func.func @transform_9(%arg0: i32) -> (i32, i32) {
    %c0_i32 = arith.constant 0 : i32
    %c0_i32_0 = arith.constant 0 : i32
    return %arg0, %c0_i32 : i32, i32
  }
}

</mosaic_0001>

<llo_original>
// kernel: normalized_mlp_forward.1
$region0: #{normalized_mlp_forward.1}
  #allocation0 [shape = 'u32[]', space=smem, size = 0x4, offset = 0x4, fixed_abs, tag = 'smem constant byte address 0x4 - core index']
  #allocation1 [shape = 'u32[144,128]{1,0:T(1,128)}', space=vmem, size = 0x12000, scoped, tag = 'internal scratch']
  %s0 = inlined_call_operand.vmem [shape: f32[3], index: 0, kind: input, shape index: {}]
  %s1 = inlined_call_operand.vmem [shape: f32[2,1024], index: 1, kind: input, shape index: {}]
  %s2 = inlined_call_operand.hbm [shape: bf16[1024,128], index: 2, kind: input, shape index: {}]
  %s3 = inlined_call_operand.vmem [shape: f32[1,128], index: 3, kind: input, shape index: {}]
  %s4 = inlined_call_operand.vmem [shape: bf16[128,128], index: 4, kind: input, shape index: {}]
  %s5 = inlined_call_operand.vmem [shape: f32[1,128], index: 5, kind: input, shape index: {}]
  %s6 = inlined_call_operand.vmem [shape: bf16[128,128], index: 6, kind: input, shape index: {}]
  %s7 = inlined_call_operand.vmem [shape: f32[1,128], index: 7, kind: input, shape index: {}]
  %s8 = inlined_call_operand.vmem [shape: f32[1,128], index: 8, kind: input, shape index: {}]
  %s9 = inlined_call_operand.vmem [shape: f32[2,1], index: 9, kind: output, shape index: {}]
  %s10 = sld [smem:[#allocation0]]
  $region54: #{normalized_mlp_forward.1} parent=0
    _
  %s12 = ssub.s32 1, %s10
  %s13 = scalar_select 0, %s12, %s10
  $region1: #{normalized_mlp_forward.1} parent=0
    #allocation2 [shape = 'u8[512]{0}', space=smem, size = 0x200, scoped, tag = 'input window, operand 0, single buffered']
    #allocation3 [shape = 's32[1]{0}', space=sflag, size = 0x4, scoped, tag = 'scoped memory for normalized_mlp_forward.1']
    #allocation4 [shape = 's32[1]{0}', space=sflag, size = 0x4, scoped, tag = 'scoped memory for normalized_mlp_forward.1']
    #allocation5 [shape = 'u8[262144]{0}', space=vmem, size = 0x40000, scoped, tag = 'input window, operand 2, single buffered']
    %14 = vsyncpa [#allocation4], 0
    %15 = vsyncpa [#allocation3], 0
    // Predicated region
    $region2: #{normalized_mlp_forward.1} parent=1 // pred_check
      _
    $region3: #{normalized_mlp_forward.1} parent=1 // pred_check_branch
      %17 = sbr.rel (0) target = $region5
    $region4: #{normalized_mlp_forward.1} parent=1 // pred_region
      %s19 = ssub.s32 16, 16
      %20 = vsyncadd [#allocation4], %s19
      %s22 = sshll.u32 %s0, 4
      %s23 = int_to_ptr.vmem [resolvable:$true] %s22
      %25 = dma.vmem_to_smem %s23, 16, [#allocation2], [#allocation4]
    $region5: #{normalized_mlp_forward.1} parent=1 // pred_fallthru
      _
    // Predicated region
    $region6: #{normalized_mlp_forward.1} parent=1 // pred_check
      _
    $region7: #{normalized_mlp_forward.1} parent=1 // pred_check_branch
      %27 = sbr.rel (0) target = $region9
    $region8: #{normalized_mlp_forward.1} parent=1 // pred_region
      _
    $region9: #{normalized_mlp_forward.1} parent=1 // pred_fallthru
      _
    // Predicated region
    $region10: #{normalized_mlp_forward.1} parent=1 // pred_check
      _
    $region11: #{normalized_mlp_forward.1} parent=1 // pred_check_branch
      %29 = sbr.rel (0) target = $region13
    $region12: #{normalized_mlp_forward.1} parent=1 // pred_region
      %s31 = ssub.s32 8192, 8192
      %32 = vsyncadd [#allocation3], %s31
      %s33 = sshll.u32 [#allocation5], 4
      %s34 = int_to_ptr.vmem [resolvable:$true] %s33
      %39 = dma.hbm_to_vmem [thread:$0]  %s2, 8192, %s34, [#allocation3], 64, 64, 4
    $region13: #{normalized_mlp_forward.1} parent=1 // pred_fallthru
      _
    // Predicated region
    $region14: #{normalized_mlp_forward.1} parent=1 // pred_check
      _
    $region15: #{normalized_mlp_forward.1} parent=1 // pred_check_branch
      %41 = sbr.rel (0) target = $region17
    $region16: #{normalized_mlp_forward.1} parent=1 // pred_region
      _
    $region17: #{normalized_mlp_forward.1} parent=1 // pred_fallthru
      _
    // Predicated region
    $region18: #{normalized_mlp_forward.1} parent=1 // pred_check
      _
    $region19: #{normalized_mlp_forward.1} parent=1 // pred_check_branch
      %43 = sbr.rel (0) target = $region21
    $region20: #{normalized_mlp_forward.1} parent=1 // pred_region
      _
    $region21: #{normalized_mlp_forward.1} parent=1 // pred_fallthru
      _
    // Predicated region
    $region22: #{normalized_mlp_forward.1} parent=1 // pred_check
      _
    $region23: #{normalized_mlp_forward.1} parent=1 // pred_check_branch
      %45 = sbr.rel (0) target = $region25
    $region24: #{normalized_mlp_forward.1} parent=1 // pred_region
      _
    $region25: #{normalized_mlp_forward.1} parent=1 // pred_fallthru
      _
    // Predicated region
    $region26: #{normalized_mlp_forward.1} parent=1 // pred_check
      _
    $region27: #{normalized_mlp_forward.1} parent=1 // pred_check_branch
      %47 = sbr.rel (0) target = $region29
    $region28: #{normalized_mlp_forward.1} parent=1 // pred_region
      _
    $region29: #{normalized_mlp_forward.1} parent=1 // pred_fallthru
      _
    // Predicated region
    $region30: #{normalized_mlp_forward.1} parent=1 // pred_check
      _
    $region31: #{normalized_mlp_forward.1} parent=1 // pred_check_branch
      %49 = sbr.rel (0) target = $region33
    $region32: #{normalized_mlp_forward.1} parent=1 // pred_region
      _
    $region33: #{normalized_mlp_forward.1} parent=1 // pred_fallthru
      _
    // Predicated region
    $region34: #{normalized_mlp_forward.1} parent=1 // pred_check
      _
    $region35: #{normalized_mlp_forward.1} parent=1 // pred_check_branch
      %51 = sbr.rel (0) target = $region37
    $region36: #{normalized_mlp_forward.1} parent=1 // pred_region
      _
    $region37: #{normalized_mlp_forward.1} parent=1 // pred_fallthru
      _
    // Predicated region
    $region38: #{normalized_mlp_forward.1} parent=1 // pred_check
      _
    $region39: #{normalized_mlp_forward.1} parent=1 // pred_check_branch
      %53 = sbr.rel (0) target = $region41
    $region40: #{normalized_mlp_forward.1} parent=1 // pred_region
      %54 = dma.done [#allocation4], 16
    $region41: #{normalized_mlp_forward.1} parent=1 // pred_fallthru
      _
    // Predicated region
    $region42: #{normalized_mlp_forward.1} parent=1 // pred_check
      _
    $region43: #{normalized_mlp_forward.1} parent=1 // pred_check_branch
      %56 = sbr.rel (0) target = $region45
    $region44: #{normalized_mlp_forward.1} parent=1 // pred_region
      %57 = dma.done [#allocation3], 8192
    $region45: #{normalized_mlp_forward.1} parent=1 // pred_fallthru
      _
    %58 = sfence
    %s60 = sld [smem:[#allocation2]]
    %s61 = sld [smem:[#allocation2 + $0x1]]
    %s62 = sld [smem:[#allocation2 + $0x2]]
    %v63 = vld [vmem:[%s1] sm:$0xff]
    %v64 = vld [vmem:[%s1 + $0x8] sm:$0xff]
    %v65 = vstv %s60
    %v66 = vsub.f32 %v63, %v65
    %v67 = vsub.f32 %v64, %v65
    %v70 = vcombine.high %v66, %v66
    %v72 = vunpack.c.l.s4 1983009808
    %v73 = vunpack.c.0.s8 %v72
    %v74 = vlaneseq
    %v75 = vshrl.u32 %v74, 7
    %v76 = vsub.s32 %v73, %v75
    %v77 = vrot.slane %v66, %v76
    %v79 = vunpack.c.l.s4 1983009808
    %v80 = vunpack.c.0.s8 %v79
    %v81 = vlaneseq
    %v82 = vshrl.u32 %v81, 7
    %v83 = vsub.s32 %v80, %v82
    %v84 = vrot.slane %v70, %v83
    %v85 = vcombine.high %v77, %v77
    %v86 = vcombine.high %v84, %v84
    %v87 = vcombine.high %v67, %v67
    %v89 = vunpack.c.l.s4 1983009808
    %v90 = vunpack.c.0.s8 %v89
    %v91 = vlaneseq
    %v92 = vshrl.u32 %v91, 7
    %v93 = vsub.s32 %v90, %v92
    %v94 = vrot.slane %v67, %v93
    %v96 = vunpack.c.l.s4 1983009808
    %v97 = vunpack.c.0.s8 %v96
    %v98 = vlaneseq
    %v99 = vshrl.u32 %v98, 7
    %v100 = vsub.s32 %v97, %v99
    %v101 = vrot.slane %v87, %v100
    %v102 = vcombine.high %v94, %v94
    %v103 = vcombine.high %v101, %v101
    %v112 = vpack.c.bf16 %v77, %v77
    %v113 = vpack.c.bf16 %v85, %v85
    %v114 = vpack.c.bf16 %v84, %v84
    %v115 = vpack.c.bf16 %v86, %v86
    %v116 = vpack.c.bf16 %v94, %v94
    %v117 = vpack.c.bf16 %v102, %v102
    %v118 = vpack.c.bf16 %v101, %v101
    %v119 = vpack.c.bf16 %v103, %v103
    %v120 = vld [vmem:[#allocation5] sm:$0xf]
    %v121 = vld [vmem:[#allocation5 + $0x4] sm:$0xf]
    %v122 = vld [vmem:[#allocation5 + $0x8] sm:$0xf]
    %v123 = vld [vmem:[#allocation5 + $0xc] sm:$0xf]
    %v124 = vld [vmem:[#allocation5 + $0x10] sm:$0xf]
    %v125 = vld [vmem:[#allocation5 + $0x14] sm:$0xf]
    %v126 = vld [vmem:[#allocation5 + $0x18] sm:$0xf]
    %v127 = vld [vmem:[#allocation5 + $0x1c] sm:$0xf]
    %v128 = vld [vmem:[#allocation5 + $0x20] sm:$0xf]
    %v129 = vld [vmem:[#allocation5 + $0x24] sm:$0xf]
    %v130 = vld [vmem:[#allocation5 + $0x28] sm:$0xf]
    %v131 = vld [vmem:[#allocation5 + $0x2c] sm:$0xf]
    %v132 = vld [vmem:[#allocation5 + $0x30] sm:$0xf]
    %v133 = vld [vmem:[#allocation5 + $0x34] sm:$0xf]
    %v134 = vld [vmem:[#allocation5 + $0x38] sm:$0xf]
    %v135 = vld [vmem:[#allocation5 + $0x3c] sm:$0xf]
    %v136 = vld [vmem:[#allocation5 + $0x40] sm:$0xf]
    %v137 = vld [vmem:[#allocation5 + $0x44] sm:$0xf]
    %v138 = vld [vmem:[#allocation5 + $0x48] sm:$0xf]
    %v139 = vld [vmem:[#allocation5 + $0x4c] sm:$0xf]
    %v140 = vld [vmem:[#allocation5 + $0x50] sm:$0xf]
    %v141 = vld [vmem:[#allocation5 + $0x54] sm:$0xf]
    %v142 = vld [vmem:[#allocation5 + $0x58] sm:$0xf]
    %v143 = vld [vmem:[#allocation5 + $0x5c] sm:$0xf]
    %v144 = vld [vmem:[#allocation5 + $0x60] sm:$0xf]
    %v145 = vld [vmem:[#allocation5 + $0x64] sm:$0xf]
    %v146 = vld [vmem:[#allocation5 + $0x68] sm:$0xf]
    %v147 = vld [vmem:[#allocation5 + $0x6c] sm:$0xf]
    %v148 = vld [vmem:[#allocation5 + $0x70] sm:$0xf]
    %v149 = vld [vmem:[#allocation5 + $0x74] sm:$0xf]
    %v150 = vld [vmem:[#allocation5 + $0x78] sm:$0xf]
    %v151 = vld [vmem:[#allocation5 + $0x7c] sm:$0xf]
    %v152 = vld [vmem:[#allocation5 + $0x80] sm:$0xf]
    %v153 = vld [vmem:[#allocation5 + $0x84] sm:$0xf]
    %v154 = vld [vmem:[#allocation5 + $0x88] sm:$0xf]
    %v155 = vld [vmem:[#allocation5 + $0x8c] sm:$0xf]
    %v156 = vld [vmem:[#allocation5 + $0x90] sm:$0xf]
    %v157 = vld [vmem:[#allocation5 + $0x94] sm:$0xf]
    %v158 = vld [vmem:[#allocation5 + $0x98] sm:$0xf]
    %v159 = vld [vmem:[#allocation5 + $0x9c] sm:$0xf]
    %v160 = vld [vmem:[#allocation5 + $0xa0] sm:$0xf]
    %v161 = vld [vmem:[#allocation5 + $0xa4] sm:$0xf]
    %v162 = vld [vmem:[#allocation5 + $0xa8] sm:$0xf]
    %v163 = vld [vmem:[#allocation5 + $0xac] sm:$0xf]
    %v164 = vld [vmem:[#allocation5 + $0xb0] sm:$0xf]
    %v165 = vld [vmem:[#allocation5 + $0xb4] sm:$0xf]
    %v166 = vld [vmem:[#allocation5 + $0xb8] sm:$0xf]
    %v167 = vld [vmem:[#allocation5 + $0xbc] sm:$0xf]
    %v168 = vld [vmem:[#allocation5 + $0xc0] sm:$0xf]
    %v169 = vld [vmem:[#allocation5 + $0xc4] sm:$0xf]
    %v170 = vld [vmem:[#allocation5 + $0xc8] sm:$0xf]
    %v171 = vld [vmem:[#allocation5 + $0xcc] sm:$0xf]
    %v172 = vld [vmem:[#allocation5 + $0xd0] sm:$0xf]
    %v173 = vld [vmem:[#allocation5 + $0xd4] sm:$0xf]
    %v174 = vld [vmem:[#allocation5 + $0xd8] sm:$0xf]
    %v175 = vld [vmem:[#allocation5 + $0xdc] sm:$0xf]
    %v176 = vld [vmem:[#allocation5 + $0xe0] sm:$0xf]
    %v177 = vld [vmem:[#allocation5 + $0xe4] sm:$0xf]
    %v178 = vld [vmem:[#allocation5 + $0xe8] sm:$0xf]
    %v179 = vld [vmem:[#allocation5 + $0xec] sm:$0xf]
    %v180 = vld [vmem:[#allocation5 + $0xf0] sm:$0xf]
    %v181 = vld [vmem:[#allocation5 + $0xf4] sm:$0xf]
    %v182 = vld [vmem:[#allocation5 + $0xf8] sm:$0xf]
    %v183 = vld [vmem:[#allocation5 + $0xfc] sm:$0xf]
    %v184 = vld [vmem:[#allocation5 + $0x100] sm:$0xf]
    %v185 = vld [vmem:[#allocation5 + $0x104] sm:$0xf]
    %v186 = vld [vmem:[#allocation5 + $0x108] sm:$0xf]
    %v187 = vld [vmem:[#allocation5 + $0x10c] sm:$0xf]
    %v188 = vld [vmem:[#allocation5 + $0x110] sm:$0xf]
    %v189 = vld [vmem:[#allocation5 + $0x114] sm:$0xf]
    %v190 = vld [vmem:[#allocation5 + $0x118] sm:$0xf]
    %v191 = vld [vmem:[#allocation5 + $0x11c] sm:$0xf]
    %v192 = vld [vmem:[#allocation5 + $0x120] sm:$0xf]
    %v193 = vld [vmem:[#allocation5 + $0x124] sm:$0xf]
    %v194 = vld [vmem:[#allocation5 + $0x128] sm:$0xf]
    %v195 = vld [vmem:[#allocation5 + $0x12c] sm:$0xf]
    %v196 = vld [vmem:[#allocation5 + $0x130] sm:$0xf]
    %v197 = vld [vmem:[#allocation5 + $0x134] sm:$0xf]
    %v198 = vld [vmem:[#allocation5 + $0x138] sm:$0xf]
    %v199 = vld [vmem:[#allocation5 + $0x13c] sm:$0xf]
    %v200 = vld [vmem:[#allocation5 + $0x140] sm:$0xf]
    %v201 = vld [vmem:[#allocation5 + $0x144] sm:$0xf]
    %v202 = vld [vmem:[#allocation5 + $0x148] sm:$0xf]
    %v203 = vld [vmem:[#allocation5 + $0x14c] sm:$0xf]
    %v204 = vld [vmem:[#allocation5 + $0x150] sm:$0xf]
    %v205 = vld [vmem:[#allocation5 + $0x154] sm:$0xf]
    %v206 = vld [vmem:[#allocation5 + $0x158] sm:$0xf]
    %v207 = vld [vmem:[#allocation5 + $0x15c] sm:$0xf]
    %v208 = vld [vmem:[#allocation5 + $0x160] sm:$0xf]
    %v209 = vld [vmem:[#allocation5 + $0x164] sm:$0xf]
    %v210 = vld [vmem:[#allocation5 + $0x168] sm:$0xf]
    %v211 = vld [vmem:[#allocation5 + $0x16c] sm:$0xf]
    %v212 = vld [vmem:[#allocation5 + $0x170] sm:$0xf]
    %v213 = vld [vmem:[#allocation5 + $0x174] sm:$0xf]
    %v214 = vld [vmem:[#allocation5 + $0x178] sm:$0xf]
    %v215 = vld [vmem:[#allocation5 + $0x17c] sm:$0xf]
    %v216 = vld [vmem:[#allocation5 + $0x180] sm:$0xf]
    %v217 = vld [vmem:[#allocation5 + $0x184] sm:$0xf]
    %v218 = vld [vmem:[#allocation5 + $0x188] sm:$0xf]
    %v219 = vld [vmem:[#allocation5 + $0x18c] sm:$0xf]
    %v220 = vld [vmem:[#allocation5 + $0x190] sm:$0xf]
    %v221 = vld [vmem:[#allocation5 + $0x194] sm:$0xf]
    %v222 = vld [vmem:[#allocation5 + $0x198] sm:$0xf]
    %v223 = vld [vmem:[#allocation5 + $0x19c] sm:$0xf]
    %v224 = vld [vmem:[#allocation5 + $0x1a0] sm:$0xf]
    %v225 = vld [vmem:[#allocation5 + $0x1a4] sm:$0xf]
    %v226 = vld [vmem:[#allocation5 + $0x1a8] sm:$0xf]
    %v227 = vld [vmem:[#allocation5 + $0x1ac] sm:$0xf]
    %v228 = vld [vmem:[#allocation5 + $0x1b0] sm:$0xf]
    %v229 = vld [vmem:[#allocation5 + $0x1b4] sm:$0xf]
    %v230 = vld [vmem:[#allocation5 + $0x1b8] sm:$0xf]
    %v231 = vld [vmem:[#allocation5 + $0x1bc] sm:$0xf]
    %v232 = vld [vmem:[#allocation5 + $0x1c0] sm:$0xf]
    %v233 = vld [vmem:[#allocation5 + $0x1c4] sm:$0xf]
    %v234 = vld [vmem:[#allocation5 + $0x1c8] sm:$0xf]
    %v235 = vld [vmem:[#allocation5 + $0x1cc] sm:$0xf]
    %v236 = vld [vmem:[#allocation5 + $0x1d0] sm:$0xf]
    %v237 = vld [vmem:[#allocation5 + $0x1d4] sm:$0xf]
    %v238 = vld [vmem:[#allocation5 + $0x1d8] sm:$0xf]
    %v239 = vld [vmem:[#allocation5 + $0x1dc] sm:$0xf]
    %v240 = vld [vmem:[#allocation5 + $0x1e0] sm:$0xf]
    %v241 = vld [vmem:[#allocation5 + $0x1e4] sm:$0xf]
    %v242 = vld [vmem:[#allocation5 + $0x1e8] sm:$0xf]
    %v243 = vld [vmem:[#allocation5 + $0x1ec] sm:$0xf]
    %v244 = vld [vmem:[#allocation5 + $0x1f0] sm:$0xf]
    %v245 = vld [vmem:[#allocation5 + $0x1f4] sm:$0xf]
    %v246 = vld [vmem:[#allocation5 + $0x1f8] sm:$0xf]
    %v247 = vld [vmem:[#allocation5 + $0x1fc] sm:$0xf]
    %v376 = vunpack.c.l.b16 %v120
    %v377 = vunpack.c.l.b16 %v121
    %v378 = vunpack.c.l.b16 %v122
    %v379 = vunpack.c.l.b16 %v123
    %v380 = vunpack.c.l.b16 %v124
    %v381 = vunpack.c.l.b16 %v125
    %v382 = vunpack.c.l.b16 %v126
    %v383 = vunpack.c.l.b16 %v127
    %v384 = vunpack.c.l.b16 %v128
    %v385 = vunpack.c.l.b16 %v129
    %v386 = vunpack.c.l.b16 %v130
    %v387 = vunpack.c.l.b16 %v131
    %v388 = vunpack.c.l.b16 %v132
    %v389 = vunpack.c.l.b16 %v133
    %v390 = vunpack.c.l.b16 %v134
    %v391 = vunpack.c.l.b16 %v135
    %v392 = vunpack.c.l.b16 %v136
    %v393 = vunpack.c.l.b16 %v137
    %v394 = vunpack.c.l.b16 %v138
    %v395 = vunpack.c.l.b16 %v139
    %v396 = vunpack.c.l.b16 %v140
    %v397 = vunpack.c.l.b16 %v141
    %v398 = vunpack.c.l.b16 %v142
    %v399 = vunpack.c.l.b16 %v143
    %v400 = vunpack.c.l.b16 %v144
    %v401 = vunpack.c.l.b16 %v145
    %v402 = vunpack.c.l.b16 %v146
    %v403 = vunpack.c.l.b16 %v147
    %v404 = vunpack.c.l.b16 %v148
    %v405 = vunpack.c.l.b16 %v149
    %v406 = vunpack.c.l.b16 %v150
    %v407 = vunpack.c.l.b16 %v151
    %v408 = vunpack.c.l.b16 %v152
    %v409 = vunpack.c.l.b16 %v153
    %v410 = vunpack.c.l.b16 %v154
    %v411 = vunpack.c.l.b16 %v155
    %v412 = vunpack.c.l.b16 %v156
    %v413 = vunpack.c.l.b16 %v157
    %v414 = vunpack.c.l.b16 %v158
    %v415 = vunpack.c.l.b16 %v159
    %v416 = vunpack.c.l.b16 %v160
    %v417 = vunpack.c.l.b16 %v161
    %v418 = vunpack.c.l.b16 %v162
    %v419 = vunpack.c.l.b16 %v163
    %v420 = vunpack.c.l.b16 %v164
    %v421 = vunpack.c.l.b16 %v165
    %v422 = vunpack.c.l.b16 %v166
    %v423 = vunpack.c.l.b16 %v167
    %v424 = vunpack.c.l.b16 %v168
    %v425 = vunpack.c.l.b16 %v169
    %v426 = vunpack.c.l.b16 %v170
    %v427 = vunpack.c.l.b16 %v171
    %v428 = vunpack.c.l.b16 %v172
    %v429 = vunpack.c.l.b16 %v173
    %v430 = vunpack.c.l.b16 %v174
    %v431 = vunpack.c.l.b16 %v175
    %v432 = vunpack.c.l.b16 %v176
    %v433 = vunpack.c.l.b16 %v177
    %v434 = vunpack.c.l.b16 %v178
    %v435 = vunpack.c.l.b16 %v179
    %v436 = vunpack.c.l.b16 %v180
    %v437 = vunpack.c.l.b16 %v181
    %v438 = vunpack.c.l.b16 %v182
    %v439 = vunpack.c.l.b16 %v183
    %v440 = vunpack.c.l.b16 %v184
    %v441 = vunpack.c.l.b16 %v185
    %v442 = vunpack.c.l.b16 %v186
    %v443 = vunpack.c.l.b16 %v187
    %v444 = vunpack.c.l.b16 %v188
    %v445 = vunpack.c.l.b16 %v189
    %v446 = vunpack.c.l.b16 %v190
    %v447 = vunpack.c.l.b16 %v191
    %v448 = vunpack.c.l.b16 %v192
    %v449 = vunpack.c.l.b16 %v193
    %v450 = vunpack.c.l.b16 %v194
    %v451 = vunpack.c.l.b16 %v195
    %v452 = vunpack.c.l.b16 %v196
    %v453 = vunpack.c.l.b16 %v197
    %v454 = vunpack.c.l.b16 %v198
    %v455 = vunpack.c.l.b16 %v199
    %v456 = vunpack.c.l.b16 %v200
    %v457 = vunpack.c.l.b16 %v201
    %v458 = vunpack.c.l.b16 %v202
    %v459 = vunpack.c.l.b16 %v203
    %v460 = vunpack.c.l.b16 %v204
    %v461 = vunpack.c.l.b16 %v205
    %v462 = vunpack.c.l.b16 %v206
    %v463 = vunpack.c.l.b16 %v207
    %v464 = vunpack.c.l.b16 %v208
    %v465 = vunpack.c.l.b16 %v209
    %v466 = vunpack.c.l.b16 %v210
    %v467 = vunpack.c.l.b16 %v211
    %v468 = vunpack.c.l.b16 %v212
    %v469 = vunpack.c.l.b16 %v213
    %v470 = vunpack.c.l.b16 %v214
    %v471 = vunpack.c.l.b16 %v215
    %v472 = vunpack.c.l.b16 %v216
    %v473 = vunpack.c.l.b16 %v217
    %v474 = vunpack.c.l.b16 %v218
    %v475 = vunpack.c.l.b16 %v219
    %v476 = vunpack.c.l.b16 %v220
    %v477 = vunpack.c.l.b16 %v221
    %v478 = vunpack.c.l.b16 %v222
    %v479 = vunpack.c.l.b16 %v223
    %v480 = vunpack.c.l.b16 %v224
    %v481 = vunpack.c.l.b16 %v225
    %v482 = vunpack.c.l.b16 %v226
    %v483 = vunpack.c.l.b16 %v227
    %v484 = vunpack.c.l.b16 %v228
    %v485 = vunpack.c.l.b16 %v229
    %v486 = vunpack.c.l.b16 %v230
    %v487 = vunpack.c.l.b16 %v231
    %v488 = vunpack.c.l.b16 %v232
    %v489 = vunpack.c.l.b16 %v233
    %v490 = vunpack.c.l.b16 %v234
    %v491 = vunpack.c.l.b16 %v235
    %v492 = vunpack.c.l.b16 %v236
    %v493 = vunpack.c.l.b16 %v237
    %v494 = vunpack.c.l.b16 %v238
    %v495 = vunpack.c.l.b16 %v239
    %v496 = vunpack.c.l.b16 %v240
    %v497 = vunpack.c.l.b16 %v241
    %v498 = vunpack.c.l.b16 %v242
    %v499 = vunpack.c.l.b16 %v243
    %v500 = vunpack.c.l.b16 %v244
    %v501 = vunpack.c.l.b16 %v245
    %v502 = vunpack.c.l.b16 %v246
    %v503 = vunpack.c.l.b16 %v247
    %v504 = vpack.c.b16 %v377, %v376
    %v505 = vpack.c.b16 %v379, %v378
    %v506 = vpack.c.b16 %v381, %v380
    %v507 = vpack.c.b16 %v383, %v382
    %v508 = vpack.c.b16 %v385, %v384
    %v509 = vpack.c.b16 %v387, %v386
    %v510 = vpack.c.b16 %v389, %v388
    %v511 = vpack.c.b16 %v391, %v390
    %v512 = vpack.c.b16 %v393, %v392
    %v513 = vpack.c.b16 %v395, %v394
    %v514 = vpack.c.b16 %v397, %v396
    %v515 = vpack.c.b16 %v399, %v398
    %v516 = vpack.c.b16 %v401, %v400
    %v517 = vpack.c.b16 %v403, %v402
    %v518 = vpack.c.b16 %v405, %v404
    %v519 = vpack.c.b16 %v407, %v406
    %v520 = vpack.c.b16 %v409, %v408
    %v521 = vpack.c.b16 %v411, %v410
    %v522 = vpack.c.b16 %v413, %v412
    %v523 = vpack.c.b16 %v415, %v414
    %v524 = vpack.c.b16 %v417, %v416
    %v525 = vpack.c.b16 %v419, %v418
    %v526 = vpack.c.b16 %v421, %v420
    %v527 = vpack.c.b16 %v423, %v422
    %v528 = vpack.c.b16 %v425, %v424
    %v529 = vpack.c.b16 %v427, %v426
    %v530 = vpack.c.b16 %v429, %v428
    %v531 = vpack.c.b16 %v431, %v430
    %v532 = vpack.c.b16 %v433, %v432
    %v533 = vpack.c.b16 %v435, %v434
    %v534 = vpack.c.b16 %v437, %v436
    %v535 = vpack.c.b16 %v439, %v438
    %v536 = vpack.c.b16 %v441, %v440
    %v537 = vpack.c.b16 %v443, %v442
    %v538 = vpack.c.b16 %v445, %v444
    %v539 = vpack.c.b16 %v447, %v446
    %v540 = vpack.c.b16 %v449, %v448
    %v541 = vpack.c.b16 %v451, %v450
    %v542 = vpack.c.b16 %v453, %v452
    %v543 = vpack.c.b16 %v455, %v454
    %v544 = vpack.c.b16 %v457, %v456
    %v545 = vpack.c.b16 %v459, %v458
    %v546 = vpack.c.b16 %v461, %v460
    %v547 = vpack.c.b16 %v463, %v462
    %v548 = vpack.c.b16 %v465, %v464
    %v549 = vpack.c.b16 %v467, %v466
    %v550 = vpack.c.b16 %v469, %v468
    %v551 = vpack.c.b16 %v471, %v470
    %v552 = vpack.c.b16 %v473, %v472
    %v553 = vpack.c.b16 %v475, %v474
    %v554 = vpack.c.b16 %v477, %v476
    %v555 = vpack.c.b16 %v479, %v478
    %v556 = vpack.c.b16 %v481, %v480
    %v557 = vpack.c.b16 %v483, %v482
    %v558 = vpack.c.b16 %v485, %v484
    %v559 = vpack.c.b16 %v487, %v486
    %v560 = vpack.c.b16 %v489, %v488
    %v561 = vpack.c.b16 %v491, %v490
    %v562 = vpack.c.b16 %v493, %v492
    %v563 = vpack.c.b16 %v495, %v494
    %v564 = vpack.c.b16 %v497, %v496
    %v565 = vpack.c.b16 %v499, %v498
    %v566 = vpack.c.b16 %v501, %v500
    %v567 = vpack.c.b16 %v503, %v502
    %632 = vmatprep.subr.bf16.mxu0 0
    %633 = vmatpush1.bf16.msra.mxu0 %v511
    %634 = vmatprep.subr.bf16.mxu0 0
    %635 = vmatpush1.bf16.msra.mxu0 %v510
    %636 = vmatprep.subr.bf16.mxu0 0
    %637 = vmatpush1.bf16.msra.mxu0 %v509
    %638 = vmatprep.subr.bf16.mxu0 0
    %639 = vmatpush1.bf16.msra.mxu0 %v508
    %640 = vmatprep.subr.bf16.mxu0 0
    %641 = vmatpush1.bf16.msra.mxu0 %v507
    %642 = vmatprep.subr.bf16.mxu0 0
    %643 = vmatpush1.bf16.msra.mxu0 %v506
    %644 = vmatprep.subr.bf16.mxu0 0
    %645 = vmatpush1.bf16.msra.mxu0 %v505
    %646 = vmatprep.subr.bf16.mxu0 0
    %647 = vmatpush1.bf16.msra.mxu0 %v504
    %648 = vmatprep.subr.bf16.mxu0 0
    %649 = vmatpush2.bf16.msra.mxu0 %v519
    %650 = vmatprep.subr.bf16.mxu0 0
    %651 = vmatpush2.bf16.msra.mxu0 %v518
    %652 = vmatprep.subr.bf16.mxu0 0
    %653 = vmatpush2.bf16.msra.mxu0 %v517
    %654 = vmatprep.subr.bf16.mxu0 0
    %655 = vmatpush2.bf16.msra.mxu0 %v516
    %656 = vmatprep.subr.bf16.mxu0 0
    %657 = vmatpush2.bf16.msra.mxu0 %v515
    %658 = vmatprep.subr.bf16.mxu0 0
    %659 = vmatpush2.bf16.msra.mxu0 %v514
    %660 = vmatprep.subr.bf16.mxu0 0
    %661 = vmatpush2.bf16.msra.mxu0 %v513
    %662 = vmatprep.subr.bf16.mxu0 0
    %663 = vmatpush2.bf16.msra.mxu0 %v512
    %664 = vmatprep.mubr.bf16.mxu0 %v113
    %665 = vmatmul.mubr.bf16.gmra.mxu0 %v112
    %v666 = vpop.f32.mrf.mxu0
    %v667 = vadd.f32 0.0, %v666
    %v668 = vpop.f32.mrf.mxu0
    %v669 = vpop.f32.mrf.mxu0
    %v670 = vpop.f32.mrf.mxu0
    %671 = vdwg.mxu0
    %672 = vmatprep.subr.bf16.mxu0 0
    %673 = vmatpush1.bf16.msra.mxu0 %v527
    %674 = vmatprep.subr.bf16.mxu0 0
    %675 = vmatpush1.bf16.msra.mxu0 %v526
    %676 = vmatprep.subr.bf16.mxu0 0
    %677 = vmatpush1.bf16.msra.mxu0 %v525
    %678 = vmatprep.subr.bf16.mxu0 0
    %679 = vmatpush1.bf16.msra.mxu0 %v524
    %680 = vmatprep.subr.bf16.mxu0 0
    %681 = vmatpush1.bf16.msra.mxu0 %v523
    %682 = vmatprep.subr.bf16.mxu0 0
    %683 = vmatpush1.bf16.msra.mxu0 %v522
    %684 = vmatprep.subr.bf16.mxu0 0
    %685 = vmatpush1.bf16.msra.mxu0 %v521
    %686 = vmatprep.subr.bf16.mxu0 0
    %687 = vmatpush1.bf16.msra.mxu0 %v520
    %688 = vmatprep.subr.bf16.mxu0 0
    %689 = vmatpush2.bf16.msra.mxu0 %v535
    %690 = vmatprep.subr.bf16.mxu0 0
    %691 = vmatpush2.bf16.msra.mxu0 %v534
    %692 = vmatprep.subr.bf16.mxu0 0
    %693 = vmatpush2.bf16.msra.mxu0 %v533
    %694 = vmatprep.subr.bf16.mxu0 0
    %695 = vmatpush2.bf16.msra.mxu0 %v532
    %696 = vmatprep.subr.bf16.mxu0 0
    %697 = vmatpush2.bf16.msra.mxu0 %v531
    %698 = vmatprep.subr.bf16.mxu0 0
    %699 = vmatpush2.bf16.msra.mxu0 %v530
    %700 = vmatprep.subr.bf16.mxu0 0
    %701 = vmatpush2.bf16.msra.mxu0 %v529
    %702 = vmatprep.subr.bf16.mxu0 0
    %703 = vmatpush2.bf16.msra.mxu0 %v528
    %704 = vmatprep.mubr.bf16.mxu0 %v115
    %705 = vmatmul.mubr.bf16.gmra.mxu0 %v114
    %v706 = vpop.f32.mrf.mxu0
    %v707 = vadd.f32 %v667, %v706
    %v708 = vpop.f32.mrf.mxu0
    %v709 = vpop.f32.mrf.mxu0
    %v710 = vpop.f32.mrf.mxu0
    %711 = vdwg.mxu0
    %712 = vmatprep.subr.bf16.mxu0 0
    %713 = vmatpush1.bf16.msra.mxu0 %v543
    %714 = vmatprep.subr.bf16.mxu0 0
    %715 = vmatpush1.bf16.msra.mxu0 %v542
    %716 = vmatprep.subr.bf16.mxu0 0
    %717 = vmatpush1.bf16.msra.mxu0 %v541
    %718 = vmatprep.subr.bf16.mxu0 0
    %719 = vmatpush1.bf16.msra.mxu0 %v540
    %720 = vmatprep.subr.bf16.mxu0 0
    %721 = vmatpush1.bf16.msra.mxu0 %v539
    %722 = vmatprep.subr.bf16.mxu0 0
    %723 = vmatpush1.bf16.msra.mxu0 %v538
    %724 = vmatprep.subr.bf16.mxu0 0
    %725 = vmatpush1.bf16.msra.mxu0 %v537
    %726 = vmatprep.subr.bf16.mxu0 0
    %727 = vmatpush1.bf16.msra.mxu0 %v536
    %728 = vmatprep.subr.bf16.mxu0 0
    %729 = vmatpush2.bf16.msra.mxu0 %v551
    %730 = vmatprep.subr.bf16.mxu0 0
    %731 = vmatpush2.bf16.msra.mxu0 %v550
    %732 = vmatprep.subr.bf16.mxu0 0
    %733 = vmatpush2.bf16.msra.mxu0 %v549
    %734 = vmatprep.subr.bf16.mxu0 0
    %735 = vmatpush2.bf16.msra.mxu0 %v548
    %736 = vmatprep.subr.bf16.mxu0 0
    %737 = vmatpush2.bf16.msra.mxu0 %v547
    %738 = vmatprep.subr.bf16.mxu0 0
    %739 = vmatpush2.bf16.msra.mxu0 %v546
    %740 = vmatprep.subr.bf16.mxu0 0
    %741 = vmatpush2.bf16.msra.mxu0 %v545
    %742 = vmatprep.subr.bf16.mxu0 0
    %743 = vmatpush2.bf16.msra.mxu0 %v544
    %744 = vmatprep.mubr.bf16.mxu0 %v117
    %745 = vmatmul.mubr.bf16.gmra.mxu0 %v116
    %v746 = vpop.f32.mrf.mxu0
    %v747 = vadd.f32 %v707, %v746
    %v748 = vpop.f32.mrf.mxu0
    %v749 = vpop.f32.mrf.mxu0
    %v750 = vpop.f32.mrf.mxu0
    %751 = vdwg.mxu0
    %752 = vmatprep.subr.bf16.mxu0 0
    %753 = vmatpush1.bf16.msra.mxu0 %v559
    %754 = vmatprep.subr.bf16.mxu0 0
    %755 = vmatpush1.bf16.msra.mxu0 %v558
    %756 = vmatprep.subr.bf16.mxu0 0
    %757 = vmatpush1.bf16.msra.mxu0 %v557
    %758 = vmatprep.subr.bf16.mxu0 0
    %759 = vmatpush1.bf16.msra.mxu0 %v556
    %760 = vmatprep.subr.bf16.mxu0 0
    %761 = vmatpush1.bf16.msra.mxu0 %v555
    %762 = vmatprep.subr.bf16.mxu0 0
    %763 = vmatpush1.bf16.msra.mxu0 %v554
    %764 = vmatprep.subr.bf16.mxu0 0
    %765 = vmatpush1.bf16.msra.mxu0 %v553
    %766 = vmatprep.subr.bf16.mxu0 0
    %767 = vmatpush1.bf16.msra.mxu0 %v552
    %768 = vmatprep.subr.bf16.mxu0 0
    %769 = vmatpush2.bf16.msra.mxu0 %v567
    %770 = vmatprep.subr.bf16.mxu0 0
    %771 = vmatpush2.bf16.msra.mxu0 %v566
    %772 = vmatprep.subr.bf16.mxu0 0
    %773 = vmatpush2.bf16.msra.mxu0 %v565
    %774 = vmatprep.subr.bf16.mxu0 0
    %775 = vmatpush2.bf16.msra.mxu0 %v564
    %776 = vmatprep.subr.bf16.mxu0 0
    %777 = vmatpush2.bf16.msra.mxu0 %v563
    %778 = vmatprep.subr.bf16.mxu0 0
    %779 = vmatpush2.bf16.msra.mxu0 %v562
    %780 = vmatprep.subr.bf16.mxu0 0
    %781 = vmatpush2.bf16.msra.mxu0 %v561
    %782 = vmatprep.subr.bf16.mxu0 0
    %783 = vmatpush2.bf16.msra.mxu0 %v560
    %784 = vmatprep.mubr.bf16.mxu0 %v119
    %785 = vmatmul.mubr.bf16.gmra.mxu0 %v118
    %v786 = vpop.f32.mrf.mxu0
    %v787 = vadd.f32 %v747, %v786
    %v788 = vpop.f32.mrf.mxu0
    %v789 = vpop.f32.mrf.mxu0
    %v790 = vpop.f32.mrf.mxu0
    %791 = vdwg.mxu0
    %v792 = vstv %s61
    %v793 = vmul.f32 %v787, %v792
    %v794 = vld [vmem:[%s3] sm:$0x1]
    %v796 = vlaneseq
    %v797 = vshrl.u32 %v796, 7
    %v798 = vsub.s32 0, %v797
    %v799 = vrot.slane %v794, %v798
    %v801 = vadd.f32 %v793, %v799
    %v802 = vxor.u32 %v801, 2147483648
    %v803 = vmul.f32 %v802, 1.442695
    %v804 = vpow.pop %v803
    %v805 = vadd.f32 %v804, 1.0
    %v806 = vrcp.pop %v805
    %v807 = vmul.f32 1.0, %v806
    %v808 = vmul.f32 %v801, %v807
    %v809 = vpack.c.bf16 %v808, %v808
    %v810 = vld [vmem:[%s4] sm:$0xf]
    %v811 = vld [vmem:[%s4 + $0x4] sm:$0xf]
    %v812 = vld [vmem:[%s4 + $0x8] sm:$0xf]
    %v813 = vld [vmem:[%s4 + $0xc] sm:$0xf]
    %v814 = vld [vmem:[%s4 + $0x10] sm:$0xf]
    %v815 = vld [vmem:[%s4 + $0x14] sm:$0xf]
    %v816 = vld [vmem:[%s4 + $0x18] sm:$0xf]
    %v817 = vld [vmem:[%s4 + $0x1c] sm:$0xf]
    %v818 = vld [vmem:[%s4 + $0x20] sm:$0xf]
    %v819 = vld [vmem:[%s4 + $0x24] sm:$0xf]
    %v820 = vld [vmem:[%s4 + $0x28] sm:$0xf]
    %v821 = vld [vmem:[%s4 + $0x2c] sm:$0xf]
    %v822 = vld [vmem:[%s4 + $0x30] sm:$0xf]
    %v823 = vld [vmem:[%s4 + $0x34] sm:$0xf]
    %v824 = vld [vmem:[%s4 + $0x38] sm:$0xf]
    %v825 = vld [vmem:[%s4 + $0x3c] sm:$0xf]
    %v826 = vld [vmem:[%s5] sm:$0x1]
    %v828 = vlaneseq
    %v829 = vshrl.u32 %v828, 7
    %v830 = vsub.s32 0, %v829
    %v831 = vrot.slane %v826, %v830
    %v849 = vunpack.c.l.b16 %v810
    %v850 = vunpack.c.l.b16 %v811
    %v851 = vunpack.c.l.b16 %v812
    %v852 = vunpack.c.l.b16 %v813
    %v853 = vunpack.c.l.b16 %v814
    %v854 = vunpack.c.l.b16 %v815
    %v855 = vunpack.c.l.b16 %v816
    %v856 = vunpack.c.l.b16 %v817
    %v857 = vunpack.c.l.b16 %v818
    %v858 = vunpack.c.l.b16 %v819
    %v859 = vunpack.c.l.b16 %v820
    %v860 = vunpack.c.l.b16 %v821
    %v861 = vunpack.c.l.b16 %v822
    %v862 = vunpack.c.l.b16 %v823
    %v863 = vunpack.c.l.b16 %v824
    %v864 = vunpack.c.l.b16 %v825
    %v865 = vpack.c.b16 %v850, %v849
    %v866 = vpack.c.b16 %v852, %v851
    %v867 = vpack.c.b16 %v854, %v853
    %v868 = vpack.c.b16 %v856, %v855
    %v869 = vpack.c.b16 %v858, %v857
    %v870 = vpack.c.b16 %v860, %v859
    %v871 = vpack.c.b16 %v862, %v861
    %v872 = vpack.c.b16 %v864, %v863
    %881 = vmatprep.subr.bf16.mxu0 0
    %882 = vmatpush1.bf16.msra.mxu0 %v872
    %883 = vmatprep.subr.bf16.mxu0 0
    %884 = vmatpush1.bf16.msra.mxu0 %v871
    %885 = vmatprep.subr.bf16.mxu0 0
    %886 = vmatpush1.bf16.msra.mxu0 %v870
    %887 = vmatprep.subr.bf16.mxu0 0
    %888 = vmatpush1.bf16.msra.mxu0 %v869
    %889 = vmatprep.subr.bf16.mxu0 0
    %890 = vmatpush1.bf16.msra.mxu0 %v868
    %891 = vmatprep.subr.bf16.mxu0 0
    %892 = vmatpush1.bf16.msra.mxu0 %v867
    %893 = vmatprep.subr.bf16.mxu0 0
    %894 = vmatpush1.bf16.msra.mxu0 %v866
    %895 = vmatprep.subr.bf16.mxu0 0
    %896 = vmatpush1.bf16.msra.mxu0 %v865
    %897 = vmatprep.subr.bf16.mxu0 0
    %898 = vmatpush2.bf16.msra.mxu0 0
    %899 = vmatprep.subr.bf16.mxu0 0
    %900 = vmatpush2.bf16.msra.mxu0 0
    %901 = vmatprep.subr.bf16.mxu0 0
    %902 = vmatpush2.bf16.msra.mxu0 0
    %903 = vmatprep.subr.bf16.mxu0 0
    %904 = vmatpush2.bf16.msra.mxu0 0
    %905 = vmatprep.subr.bf16.mxu0 0
    %906 = vmatpush2.bf16.msra.mxu0 0
    %907 = vmatprep.subr.bf16.mxu0 0
    %908 = vmatpush2.bf16.msra.mxu0 0
    %909 = vmatprep.subr.bf16.mxu0 0
    %910 = vmatpush2.bf16.msra.mxu0 0
    %911 = vmatprep.subr.bf16.mxu0 0
    %912 = vmatpush2.bf16.msra.mxu0 0
    %913 = vmatprep.mubr.bf16.mxu0 0
    %914 = vmatmul.mubr.bf16.gmra.mxu0 %v809
    %v915 = vpop.f32.mrf.mxu0
    %v916 = vadd.f32 %v831, %v915
    %v917 = vpop.f32.mrf.mxu0
    %v918 = vpop.f32.mrf.mxu0
    %v919 = vpop.f32.mrf.mxu0
    %920 = vdwg.mxu0
    %v921 = vxor.u32 %v916, 2147483648
    %v922 = vmul.f32 %v921, 1.442695
    %v923 = vpow.pop %v922
    %v924 = vadd.f32 %v923, 1.0
    %v925 = vrcp.pop %v924
    %v926 = vmul.f32 1.0, %v925
    %v927 = vmul.f32 %v916, %v926
    %v928 = vpack.c.bf16 %v927, %v927
    %v929 = vld [vmem:[%s6] sm:$0xf]
    %v930 = vld [vmem:[%s6 + $0x4] sm:$0xf]
    %v931 = vld [vmem:[%s6 + $0x8] sm:$0xf]
    %v932 = vld [vmem:[%s6 + $0xc] sm:$0xf]
    %v933 = vld [vmem:[%s6 + $0x10] sm:$0xf]
    %v934 = vld [vmem:[%s6 + $0x14] sm:$0xf]
    %v935 = vld [vmem:[%s6 + $0x18] sm:$0xf]
    %v936 = vld [vmem:[%s6 + $0x1c] sm:$0xf]
    %v937 = vld [vmem:[%s6 + $0x20] sm:$0xf]
    %v938 = vld [vmem:[%s6 + $0x24] sm:$0xf]
    %v939 = vld [vmem:[%s6 + $0x28] sm:$0xf]
    %v940 = vld [vmem:[%s6 + $0x2c] sm:$0xf]
    %v941 = vld [vmem:[%s6 + $0x30] sm:$0xf]
    %v942 = vld [vmem:[%s6 + $0x34] sm:$0xf]
    %v943 = vld [vmem:[%s6 + $0x38] sm:$0xf]
    %v944 = vld [vmem:[%s6 + $0x3c] sm:$0xf]
    %v945 = vld [vmem:[%s7] sm:$0x1]
    %v947 = vlaneseq
    %v948 = vshrl.u32 %v947, 7
    %v949 = vsub.s32 0, %v948
    %v950 = vrot.slane %v945, %v949
    %v968 = vunpack.c.l.b16 %v929
    %v969 = vunpack.c.l.b16 %v930
    %v970 = vunpack.c.l.b16 %v931
    %v971 = vunpack.c.l.b16 %v932
    %v972 = vunpack.c.l.b16 %v933
    %v973 = vunpack.c.l.b16 %v934
    %v974 = vunpack.c.l.b16 %v935
    %v975 = vunpack.c.l.b16 %v936
    %v976 = vunpack.c.l.b16 %v937
    %v977 = vunpack.c.l.b16 %v938
    %v978 = vunpack.c.l.b16 %v939
    %v979 = vunpack.c.l.b16 %v940
    %v980 = vunpack.c.l.b16 %v941
    %v981 = vunpack.c.l.b16 %v942
    %v982 = vunpack.c.l.b16 %v943
    %v983 = vunpack.c.l.b16 %v944
    %v984 = vpack.c.b16 %v969, %v968
    %v985 = vpack.c.b16 %v971, %v970
    %v986 = vpack.c.b16 %v973, %v972
    %v987 = vpack.c.b16 %v975, %v974
    %v988 = vpack.c.b16 %v977, %v976
    %v989 = vpack.c.b16 %v979, %v978
    %v990 = vpack.c.b16 %v981, %v980
    %v991 = vpack.c.b16 %v983, %v982
    %1000 = vmatprep.subr.bf16.mxu0 0
    %1001 = vmatpush1.bf16.msra.mxu0 %v991
    %1002 = vmatprep.subr.bf16.mxu0 0
    %1003 = vmatpush1.bf16.msra.mxu0 %v990
    %1004 = vmatprep.subr.bf16.mxu0 0
    %1005 = vmatpush1.bf16.msra.mxu0 %v989
    %1006 = vmatprep.subr.bf16.mxu0 0
    %1007 = vmatpush1.bf16.msra.mxu0 %v988
    %1008 = vmatprep.subr.bf16.mxu0 0
    %1009 = vmatpush1.bf16.msra.mxu0 %v987
    %1010 = vmatprep.subr.bf16.mxu0 0
    %1011 = vmatpush1.bf16.msra.mxu0 %v986
    %1012 = vmatprep.subr.bf16.mxu0 0
    %1013 = vmatpush1.bf16.msra.mxu0 %v985
    %1014 = vmatprep.subr.bf16.mxu0 0
    %1015 = vmatpush1.bf16.msra.mxu0 %v984
    %1016 = vmatprep.subr.bf16.mxu0 0
    %1017 = vmatpush2.bf16.msra.mxu0 0
    %1018 = vmatprep.subr.bf16.mxu0 0
    %1019 = vmatpush2.bf16.msra.mxu0 0
    %1020 = vmatprep.subr.bf16.mxu0 0
    %1021 = vmatpush2.bf16.msra.mxu0 0
    %1022 = vmatprep.subr.bf16.mxu0 0
    %1023 = vmatpush2.bf16.msra.mxu0 0
    %1024 = vmatprep.subr.bf16.mxu0 0
    %1025 = vmatpush2.bf16.msra.mxu0 0
    %1026 = vmatprep.subr.bf16.mxu0 0
    %1027 = vmatpush2.bf16.msra.mxu0 0
    %1028 = vmatprep.subr.bf16.mxu0 0
    %1029 = vmatpush2.bf16.msra.mxu0 0
    %1030 = vmatprep.subr.bf16.mxu0 0
    %1031 = vmatpush2.bf16.msra.mxu0 0
    %1032 = vmatprep.mubr.bf16.mxu0 0
    %1033 = vmatmul.mubr.bf16.gmra.mxu0 %v928
    %v1034 = vpop.f32.mrf.mxu0
    %v1035 = vadd.f32 %v950, %v1034
    %v1036 = vpop.f32.mrf.mxu0
    %v1037 = vpop.f32.mrf.mxu0
    %v1038 = vpop.f32.mrf.mxu0
    %1039 = vdwg.mxu0
    %v1040 = vxor.u32 %v1035, 2147483648
    %v1041 = vmul.f32 %v1040, 1.442695
    %v1042 = vpow.pop %v1041
    %v1043 = vadd.f32 %v1042, 1.0
    %v1044 = vrcp.pop %v1043
    %v1045 = vmul.f32 1.0, %v1044
    %v1046 = vmul.f32 %v1035, %v1045
    %v1047 = vld [vmem:[%s8] sm:$0x1]
    %v1049 = vlaneseq
    %v1050 = vshrl.u32 %v1049, 7
    %v1051 = vsub.s32 0, %v1050
    %v1052 = vrot.slane %v1047, %v1051
    %v1054 = vmul.f32 %v1046, %v1052
    %vm1055 = vcmask 1041408
    %v1056 = vsel %vm1055, %v1054, 0.0
    %1057 = vadd.xlane.f32.xlu0 %v1056
    %v1058 = vpop.xlane.xlu0 %1057
    %v1059 = vstv %s62
    %v1060 = vadd.f32 %v1058, %v1059
    %vm1061 = vcmask 1024
    %1062 = vst.msk [vmem:[%s9] sm:$0x3] %vm1061, %v1060
    // Predicated region
    $region46: #{normalized_mlp_forward.1} parent=1 // pred_check
      _
    $region47: #{normalized_mlp_forward.1} parent=1 // pred_check_branch
      %1064 = sbr.rel (0) target = $region49
    $region48: #{normalized_mlp_forward.1} parent=1 // pred_region
      _
    $region49: #{normalized_mlp_forward.1} parent=1 // pred_fallthru
      _
    // Predicated region
    $region50: #{normalized_mlp_forward.1} parent=1 // pred_check
      _
    $region51: #{normalized_mlp_forward.1} parent=1 // pred_check_branch
      %1066 = sbr.rel (0) target = $region53
    $region52: #{normalized_mlp_forward.1} parent=1 // pred_region
      _
    $region53: #{normalized_mlp_forward.1} parent=1 // pred_fallthru
      _
    %1067 = vsyncpa [#allocation3], 1
    %1068 = vsyncpa [#allocation4], 1

</llo_original>
